<compile_context>
chip_gen: v6e
topology: v6e:2x2x1
jax: 0.10.0
libtpu: 0.0.40
codegen_flags: <defaults>
</compile_context>

<pallas_src>
import functools

import jax
import jax.numpy as jnp
from jax.experimental import pallas as pl
from jax.experimental.pallas import tpu as pltpu


_NEG_BIG = -1e30      # plain Python float -> inlined literal (no captured const)
_TILE_Q = 256         # dst tile for large graphs
_TILE_K = 512         # src tile for large graphs


def _round_up(x, m):
    return ((x + m - 1) // m) * m


def _tile_and_pad(n):
    """Pick (n_pad, tq, tk). Small graphs: 2 dst tiles (v7x megacore), 1 src tile."""
    if n <= _TILE_K:
        n_pad = max(64, _round_up(n, 64))     # tq = n_pad/2 is a multiple of 32 (int8 adj tiling)
        return n_pad, n_pad // 2, n_pad
    n_pad = _round_up(n, _TILE_K)
    return n_pad, _TILE_Q, _TILE_K


def _gat_project_kernel(x_ref, w_ref, a_ref, h_ref, alpha_ref):
    """hproj = X @ W (bf16 out);  alpha = hproj @ A_packed (per-node logits, all heads)."""
    hproj = jnp.dot(x_ref[...], w_ref[...], preferred_element_type=jnp.float32)  # [Tq, H*C]
    h_bf = hproj.astype(jnp.bfloat16)
    h_ref[...] = h_bf
    alpha_ref[...] = jnp.dot(h_bf, a_ref[...],
                             preferred_element_type=jnp.float32)                 # [Tq, 2H]


def _gat_attend_kernel(sid_ref, cnt_ref, hsrc_ref, adst_ref, asrct_ref, adj_ref,
                       b_ref, o_ref, m_sc, l_sc, acc_sc, *, heads, cph, apply_relu):
    """Masked edge softmax + aggregation, online over (sparse) src tiles."""
    qi = pl.program_id(0)
    ki = pl.program_id(1)
    nk = pl.num_programs(1)

    @pl.when(ki == 0)
    def _init():
        m_sc[...] = jnp.full(m_sc.shape, _NEG_BIG, jnp.float32)
        l_sc[...] = jnp.zeros(l_sc.shape, jnp.float32)
        acc_sc[...] = jnp.zeros(acc_sc.shape, jnp.float32)

    @pl.when(ki < cnt_ref[qi])
    def _compute():
        adj_f = adj_ref[...].astype(jnp.float32)          # [Tq, Tk] {0,1}
        a_dst = adst_ref[...]                             # [Tq, H]  f32
        a_srct = asrct_ref[...]                           # [H, Tk]  f32
        hsrc = hsrc_ref[...]                              # [Tk, H*C] bf16

        # TODO(synk): for heads >= 4 switch to lax.fori_loop(..., unroll=True)
        # with pl.ds(h*cph, cph) slicing to bound vreg live ranges.
        for h in range(heads):
            lo = h * cph
            e = a_dst[:, h:h + 1] + a_srct[h:h + 1, :]    # [Tq, Tk]
            e = jnp.maximum(e, 0.2 * e)                   # LeakyReLU(0.2)

            m_prev = m_sc[h]                              # [Tq, 1]
            m_new = jnp.maximum(m_prev, jnp.max(e, axis=1, keepdims=True))
            scale = jnp.exp(m_prev - m_new)               # <= 1
            p = jnp.exp(e - m_new) * adj_f                # multiplicative mask
            l_sc[h] = scale * l_sc[h] + jnp.sum(p, axis=1, keepdims=True)
            acc_sc[h] = scale * acc_sc[h] + jnp.dot(
                p.astype(jnp.bfloat16), hsrc[:, lo:lo + cph],
                preferred_element_type=jnp.float32)       # [Tq, C]
            m_sc[h] = m_new

    @pl.when(ki == nk - 1)
    def _finalize():
        outs = []
        for h in range(heads):
            inv = pl.reciprocal(l_sc[h], approx=True)     # EUP slot, [Tq, 1]
            outs.append(acc_sc[h] * inv)                  # [Tq, C]
        out = jnp.concatenate(outs, axis=1) + b_ref[...]  # [Tq, H*C]
        if apply_relu:
            out = jnp.maximum(out, 0.0)
        o_ref[...] = out.astype(o_ref.dtype)              # single lane-dense store


def gat_layer(x, adj, sid, counts, w, a_packed, bias, *, heads, cph,
              apply_relu, tq, tk):
    n_pad, fin = x.shape
    hc = heads * cph
    n_qt = n_pad // tq
    max_cnt = sid.shape[1]

    # Kernel 1: projection + fused per-node attention logits (one small matmul).
    hproj, alpha = pl.pallas_call(
        _gat_project_kernel,
        out_shape=(jax.ShapeDtypeStruct((n_pad, hc), jnp.bfloat16),
                   jax.ShapeDtypeStruct((n_pad, 2 * heads), jnp.float32)),
        grid_spec=pltpu.PrefetchScalarGridSpec(
            num_scalar_prefetch=0,
            grid=(n_qt,),
            in_specs=[pl.BlockSpec((tq, fin), lambda i: (i, 0)),
                      pl.BlockSpec((fin, hc), lambda i: (0, 0)),
                      pl.BlockSpec((hc, 2 * heads), lambda i: (0, 0))],
            out_specs=[pl.BlockSpec((tq, hc), lambda i: (i, 0)),
                       pl.BlockSpec((tq, 2 * heads), lambda i: (i, 0))]),
        compiler_params=pltpu.CompilerParams(dimension_semantics=("parallel",)),
    )(x, w, a_packed)

    # Wrapper-side layout plumbing (tiny arrays): dst logits [N,H]; src logits
    # transposed to [H,N] so the kernel reads them lane-dense along src nodes.
    a_dst = alpha[:, :heads]
    a_src_t = alpha[:, heads:].T

    # Kernel 2: tiled masked softmax + aggregation with tile-level sparsity.
    out = pl.pallas_call(
        functools.partial(_gat_attend_kernel, heads=heads, cph=cph,
                          apply_relu=apply_relu),
        out_shape=jax.ShapeDtypeStruct((n_pad, hc), jnp.bfloat16),
        grid_spec=pltpu.PrefetchScalarGridSpec(
            num_scalar_prefetch=2,
            grid=(n_qt, max_cnt),
            in_specs=[pl.BlockSpec((tk, hc), lambda qi, ki, sid, cnt: (sid[qi, ki], 0)),
                      pl.BlockSpec((tq, heads), lambda qi, ki, sid, cnt: (qi, 0)),
                      pl.BlockSpec((heads, tk), lambda qi, ki, sid, cnt: (0, sid[qi, ki])),
                      pl.BlockSpec((tq, tk), lambda qi, ki, sid, cnt: (qi, sid[qi, ki])),
                      pl.BlockSpec((1, hc), lambda qi, ki, sid, cnt: (0, 0))],
            out_specs=pl.BlockSpec((tq, hc), lambda qi, ki, sid, cnt: (qi, 0)),
            scratch_shapes=[pltpu.VMEM((heads, tq, 1), jnp.float32),     # m
                            pltpu.VMEM((heads, tq, 1), jnp.float32),     # l
                            pltpu.VMEM((heads, tq, cph), jnp.float32)]),  # acc
        compiler_params=pltpu.CompilerParams(
            dimension_semantics=("parallel", "arbitrary")),
    )(sid, counts, hproj, a_dst, a_src_t, adj, bias)
    return out


class SingleSourceGNNPallas:
    """JAX/Pallas port of SingleSourceGNN (GATConv stack, concat heads, ReLU between layers)."""

    def __init__(self, in_channels, total_output_channels, num_layers, heads=1,
                 dropout=0.0, key=None):
        assert total_output_channels % heads == 0
        self.num_layers = num_layers
        self.heads = heads
        self.cph = total_output_channels // heads
        # dropout=0.0 in this synthetic setup -> attention dropout is a no-op.
        key = jax.random.PRNGKey(0) if key is None else key
        self.params = []
        for i in range(num_layers):
            fin = in_channels if i == 0 else self.cph * heads
            key, k1, k2, k3 = jax.random.split(key, 4)
            w = (jax.random.normal(k1, (fin, heads * self.cph), jnp.float32)
                 * (1.0 / jnp.sqrt(jnp.float32(fin))))
            a_src = jax.random.normal(k2, (heads, self.cph), jnp.float32) * 0.1
            a_dst = jax.random.normal(k3, (heads, self.cph), jnp.float32) * 0.1
            # Pack per-head a_dst / a_src into a block-diagonal [H*C, 2H] matrix
            # so all per-node logits come from a single MXU matmul in-kernel.
            a_packed = jnp.zeros((heads * self.cph, 2 * heads), jnp.float32)
            for h in range(heads):
                a_packed = a_packed.at[h * self.cph:(h + 1) * self.cph, h].set(a_dst[h])
                a_packed = a_packed.at[h * self.cph:(h + 1) * self.cph, heads + h].set(a_src[h])
            bias = jnp.zeros((1, heads * self.cph), jnp.float32)
            # Pre-cast MXU operands once (no per-tile casts in-kernel).
            self.params.append((w.astype(jnp.bfloat16),
                                a_packed.astype(jnp.bfloat16),
                                bias))

    def __call__(self, x, edge_index, edge_weight=None):
        # TODO(synk): edge_weight is ignored -- matches PyG GATConv with edge_dim=None.
        n = x.shape[0]
        hc = self.heads * self.cph
        if n == 0:
            return jnp.zeros((0, hc), jnp.float32)

        n_pad, tq, tk = _tile_and_pad(n)
        x_pad = jnp.zeros((n_pad, x.shape[1]), jnp.bfloat16).at[:n].set(
            x.astype(jnp.bfloat16))

        # Dense int8 adjacency mask (adj[i, j] = 1 iff edge j -> i), with
        # self-loops on every node (incl. padded) so softmax denom > 0.
        adj = jnp.zeros((n_pad, n_pad), jnp.int8)
        adj = adj.at[edge_index[1], edge_index[0]].set(jnp.int8(1))
        diag = jnp.arange(n_pad)
        adj = adj.at[diag, diag].set(jnp.int8(1))

        # Tile-level block-sparsity structure (shared by all layers):
        # per dst-tile row, list of src tiles that contain >=1 edge (+ self-loop tile).
        n_qt, n_kt = n_pad // tq, n_pad // tk
        has = jnp.zeros((n_qt, n_kt), jnp.bool_)
        has = has.at[edge_index[1] // tq, edge_index[0] // tk].set(True)
        has = has.at[diag // tq, diag // tk].set(True)
        counts = jnp.sum(has, axis=1).astype(jnp.int32)            # >= 1 everywhere
        max_cnt = int(jax.device_get(jnp.max(counts)))
        order = jnp.argsort((~has).astype(jnp.int32), axis=1, stable=True)
        sid = order[:, :max_cnt].astype(jnp.int32)
        last = jnp.take_along_axis(sid, jnp.maximum(counts - 1, 0)[:, None], axis=1)
        # Padded entries repeat the last valid tile id -> no extra DMA is issued.
        sid = jnp.where(jnp.arange(max_cnt)[None, :] < counts[:, None], sid, last)
        sid = sid.astype(jnp.int32)

        h = x_pad
        for i, (w, a_packed, bias) in enumerate(self.params):
            h = gat_layer(h, adj, sid, counts, w, a_packed, bias,
                          heads=self.heads, cph=self.cph,
                          apply_relu=(i < self.num_layers - 1), tq=tq, tk=tk)
        return h[:n].astype(jnp.float32)


if __name__ == "__main__":
    N = 16                 # number of nodes
    IN_CH = 8              # input feature channels
    TOTAL_OUT = 16         # total output channels (heads * per-head)
    HEADS = 2
    NUM_LAYERS = 2
    NUM_EDGES = 40

    key = jax.random.PRNGKey(0)
    k_x, k_src, k_dst, k_param = jax.random.split(key, 4)

    x = jax.random.normal(k_x, (N, IN_CH), jnp.float32)
    src = jax.random.randint(k_src, (NUM_EDGES,), 0, N)
    dst = jax.random.randint(k_dst, (NUM_EDGES,), 0, N)
    edge_index = jnp.stack([src, dst], axis=0)                   # [2, E]

    model = SingleSourceGNNPallas(IN_CH, TOTAL_OUT, NUM_LAYERS, heads=HEADS,
                                  dropout=0.0, key=k_param)
    out = model(x, edge_index)
    out = jax.block_until_ready(out)
    assert out.shape == (N, TOTAL_OUT)
    assert bool(jnp.all(jnp.isfinite(out)))
    print("KERNEL_OK")
</pallas_src>

<mosaic_0001>
module attributes {stable_mosaic.version = 11 : i64} {
  func.func @_gat_project_kernel(%arg0: i32, %arg1: memref<32x8xbf16, #tpu.memory_space<vmem>>, %arg2: memref<8x16xbf16, #tpu.memory_space<vmem>>, %arg3: memref<16x4xbf16, #tpu.memory_space<vmem>>, %arg4: memref<32x16xbf16, #tpu.memory_space<vmem>>, %arg5: memref<32x4xf32, #tpu.memory_space<vmem>>) attributes {dimension_semantics = [#tpu.dimension_semantics<parallel>], iteration_bounds = array<i64: 2>, scalar_prefetch = 0 : i64, scratch_operands = 0 : i64, tpu.core_type = #tpu.core_type<tc>, window_params = [{transform_indices = @transform_0, window_bounds = array<i64: 32, 8>}, {pipeline_mode = #tpu.pipeline_mode<synchronous>, transform_indices = @transform_1, window_bounds = array<i64: 8, 16>}, {pipeline_mode = #tpu.pipeline_mode<synchronous>, transform_indices = @transform_2, window_bounds = array<i64: 16, 4>}, {transform_indices = @transform_3, window_bounds = array<i64: 32, 16>}, {transform_indices = @transform_4, window_bounds = array<i64: 32, 4>}]} {
    %c0 = arith.constant 0 : index
    %c0_0 = arith.constant 0 : index
    %0 = vector.load %arg1[%c0, %c0_0] : memref<32x8xbf16, #tpu.memory_space<vmem>>, vector<32x8xbf16>
    %c0_1 = arith.constant 0 : index
    %c0_2 = arith.constant 0 : index
    %1 = vector.load %arg2[%c0_1, %c0_2] : memref<8x16xbf16, #tpu.memory_space<vmem>>, vector<8x16xbf16>
    %cst = arith.constant dense<0.000000e+00> : vector<32x16xf32>
    %2 = tpu.matmul %0, %1, %cst {dimension_numbers = #tpu.dot_dimension_numbers<[1], [0], [0], [1], [0, 0, 1, 1], [], []>} : vector<32x8xbf16>, vector<8x16xbf16>, vector<32x16xf32> -> vector<32x16xf32>
    %3 = arith.truncf %2 : vector<32x16xf32> to vector<32x16xbf16>
    %c0_3 = arith.constant 0 : index
    %c0_4 = arith.constant 0 : index
    %4 = vector.load %arg4[%c0_3, %c0_4] : memref<32x16xbf16, #tpu.memory_space<vmem>>, vector<32x16xbf16>
    tpu.vector_store %arg4[%c0_3, %c0_4], %3 {strides = array<i32>} : memref<32x16xbf16, #tpu.memory_space<vmem>>, vector<32x16xbf16>,
    %c0_5 = arith.constant 0 : index
    %c0_6 = arith.constant 0 : index
    %5 = vector.load %arg3[%c0_5, %c0_6] : memref<16x4xbf16, #tpu.memory_space<vmem>>, vector<16x4xbf16>
    %cst_7 = arith.constant dense<0.000000e+00> : vector<32x4xf32>
    %6 = tpu.matmul %3, %5, %cst_7 {dimension_numbers = #tpu.dot_dimension_numbers<[1], [0], [0], [1], [0, 0, 1, 1], [], []>} : vector<32x16xbf16>, vector<16x4xbf16>, vector<32x4xf32> -> vector<32x4xf32>
    %c0_8 = arith.constant 0 : index
    %c0_9 = arith.constant 0 : index
    %7 = vector.load %arg5[%c0_8, %c0_9] : memref<32x4xf32, #tpu.memory_space<vmem>>, vector<32x4xf32>
    tpu.vector_store %arg5[%c0_8, %c0_9], %6 {strides = array<i32>} : memref<32x4xf32, #tpu.memory_space<vmem>>, vector<32x4xf32>,
    return
  }
  func.func @transform_0(%arg0: i32) -> (i32, i32) {
    %c0_i32 = arith.constant 0 : i32
    %c0_i32_0 = arith.constant 0 : i32
    return %arg0, %c0_i32 : i32, i32
  }
  func.func @transform_1(%arg0: i32) -> (i32, i32) {
    %c0_i32 = arith.constant 0 : i32
    %c0_i32_0 = arith.constant 0 : i32
    %c0_i32_1 = arith.constant 0 : i32
    return %c0_i32, %c0_i32_0 : i32, i32
  }
  func.func @transform_2(%arg0: i32) -> (i32, i32) {
    %c0_i32 = arith.constant 0 : i32
    %c0_i32_0 = arith.constant 0 : i32
    %c0_i32_1 = arith.constant 0 : i32
    return %c0_i32, %c0_i32_0 : i32, i32
  }
  func.func @transform_3(%arg0: i32) -> (i32, i32) {
    %c0_i32 = arith.constant 0 : i32
    %c0_i32_0 = arith.constant 0 : i32
    return %arg0, %c0_i32 : i32, i32
  }
  func.func @transform_4(%arg0: i32) -> (i32, i32) {
    %c0_i32 = arith.constant 0 : i32
    %c0_i32_0 = arith.constant 0 : i32
    return %arg0, %c0_i32 : i32, i32
  }
}

</mosaic_0001>

<llo_original>
// kernel: tpu_custom_call.1
$region0: #{tpu_custom_call.1}
  #allocation0 [shape = 'u32[]', space=smem, size = 0x4, offset = 0x4, fixed_abs, tag = 'smem constant byte address 0x4 - core index']
  #allocation1 [shape = 'u32[144,128]{1,0:T(1,128)}', space=vmem, size = 0x12000, scoped, tag = 'internal scratch']
  %s0 = inlined_call_operand.vmem [shape: bf16[64,8], index: 0, kind: input, shape index: {}]
  %s1 = inlined_call_operand.vmem [shape: bf16[8,16], index: 1, kind: input, shape index: {}]
  %s2 = inlined_call_operand.vmem [shape: bf16[16,4], index: 2, kind: input, shape index: {}]
  %s3 = inlined_call_operand.vmem [shape: bf16[64,16], index: 3, kind: output, shape index: {0}]
  %s4 = inlined_call_operand.vmem [shape: f32[64,4], index: 4, kind: output, shape index: {1}]
  %5 = xla_tuple %s3, %s4
  %s6 = sld [smem:[#allocation0]]
  $region53: #{tpu_custom_call.1} parent=0
    _
  %s8 = ssub.s32 1, %s6
  %s9 = scalar_select 0, %s8, %s6
  loop: start=0, step=1, limit=4
  $region2: #{tpu_custom_call.1} parent=0 // loop_pre_header
    _
  $region3: #{tpu_custom_call.1} parent=0 // loop_header
    %s11 = sphi 0, %s15
    %p12 = scmp.ge.s32.totalorder %s11, 4
    %s21 = sphi 0, %s23
    %s24 = sphi 0, %s21
    %s25 = sphi 0, %s24
    %s41 = sphi 0, %s25
    %s45 = sphi 0, %s45
    %s47 = sphi 0, %s45
    %s48 = sphi 0, %s47
    %s62 = sphi 0, %s48
    %s66 = sphi 0, %s66
    %s68 = sphi 0, %s66
    %s69 = sphi 0, %s68
    %s83 = sphi 0, %s69
    %s89 = sphi 0, %s91
    %s92 = sphi 0, %s89
    %s93 = sphi 0, %s92
    %s109 = sphi 0, %s93
    %s115 = sphi 0, %s117
    %s118 = sphi 0, %s115
    %s119 = sphi 0, %s118
    %s135 = sphi 0, %s119
  $region4: #{tpu_custom_call.1} parent=0 // loop_header_branch
    %14 = sbr.rel (%p12) target = $region8
  $region5: #{tpu_custom_call.1} parent=0 // loop_body
    %s16 = ssub.s32 %s11, 1
    %s17 = ssub.s32 %s11, 2
    %s18 = sadd.s32 %s11, 1
    %s19 = ssub.s32 %s11, %s18
    %p20 = scmp.eq.s32.totalorder %s19, 0
    %s22 = sadd.s32 %s21, 1
    %s23 = scalar_select %p20, %s21, %s22
    %p26 = pneg %p20
    %p27 = scmp.eq.s32.totalorder %s11, 1
    %p28 = por %p26, %p27
    %p29 = scmp.ne.s32.totalorder %s21, %s24
    %p30 = scmp.eq.s32.totalorder %s11, 0
    %p31 = por %p29, %p30
    %p32 = scmp.ne.s32.totalorder %s21, %s24
    %p33 = scmp.eq.s32.totalorder %s16, 1
    %p34 = por %p32, %p33
    %p35 = scmp.ne.s32.totalorder %s24, %s25
    %p36 = scmp.eq.s32.totalorder %s16, 0
    %p37 = por %p35, %p36
    %p38 = scmp.ne.s32.totalorder %s24, %s25
    %p39 = scmp.eq.s32.totalorder %s17, 1
    %p40 = por %p38, %p39
    %p42 = scmp.ne.s32.totalorder %s25, %s41
    %p43 = scmp.eq.s32.totalorder %s17, 0
    %p44 = por %p42, %p43
    %s46 = sadd.s32 %s45, 1
    %p49 = scmp.eq.s32.totalorder %s11, 1
    %p50 = scmp.ne.s32.totalorder %s45, %s47
    %p51 = scmp.eq.s32.totalorder %s11, 0
    %p52 = por %p50, %p51
    %p53 = scmp.ne.s32.totalorder %s45, %s47
    %p54 = scmp.eq.s32.totalorder %s16, 1
    %p55 = por %p53, %p54
    %p56 = scmp.ne.s32.totalorder %s47, %s48
    %p57 = scmp.eq.s32.totalorder %s16, 0
    %p58 = por %p56, %p57
    %p59 = scmp.ne.s32.totalorder %s47, %s48
    %p60 = scmp.eq.s32.totalorder %s17, 1
    %p61 = por %p59, %p60
    %p63 = scmp.ne.s32.totalorder %s48, %s62
    %p64 = scmp.eq.s32.totalorder %s17, 0
    %p65 = por %p63, %p64
    %s67 = sadd.s32 %s66, 1
    %p70 = scmp.eq.s32.totalorder %s11, 1
    %p71 = scmp.ne.s32.totalorder %s66, %s68
    %p72 = scmp.eq.s32.totalorder %s11, 0
    %p73 = por %p71, %p72
    %p74 = scmp.ne.s32.totalorder %s66, %s68
    %p75 = scmp.eq.s32.totalorder %s16, 1
    %p76 = por %p74, %p75
    %p77 = scmp.ne.s32.totalorder %s68, %s69
    %p78 = scmp.eq.s32.totalorder %s16, 0
    %p79 = por %p77, %p78
    %p80 = scmp.ne.s32.totalorder %s68, %s69
    %p81 = scmp.eq.s32.totalorder %s17, 1
    %p82 = por %p80, %p81
    %p84 = scmp.ne.s32.totalorder %s69, %s83
    %p85 = scmp.eq.s32.totalorder %s17, 0
    %p86 = por %p84, %p85
    %s87 = ssub.s32 %s11, %s18
    %p88 = scmp.eq.s32.totalorder %s87, 0
    %s90 = sadd.s32 %s89, 1
    %s91 = scalar_select %p88, %s89, %s90
    %p94 = pneg %p88
    %p95 = scmp.eq.s32.totalorder %s11, 1
    %p96 = por %p94, %p95
    %p97 = scmp.ne.s32.totalorder %s89, %s92
    %p98 = scmp.eq.s32.totalorder %s11, 0
    %p99 = por %p97, %p98
    %p100 = scmp.ne.s32.totalorder %s89, %s92
    %p101 = scmp.eq.s32.totalorder %s16, 1
    %p102 = por %p100, %p101
    %p103 = scmp.ne.s32.totalorder %s92, %s93
    %p104 = scmp.eq.s32.totalorder %s16, 0
    %p105 = por %p103, %p104
    %p106 = scmp.ne.s32.totalorder %s92, %s93
    %p107 = scmp.eq.s32.totalorder %s17, 1
    %p108 = por %p106, %p107
    %p110 = scmp.ne.s32.totalorder %s93, %s109
    %p111 = scmp.eq.s32.totalorder %s17, 0
    %p112 = por %p110, %p111
    %s113 = ssub.s32 %s11, %s18
    %p114 = scmp.eq.s32.totalorder %s113, 0
    %s116 = sadd.s32 %s115, 1
    %s117 = scalar_select %p114, %s115, %s116
    %p120 = pneg %p114
    %p121 = scmp.eq.s32.totalorder %s11, 1
    %p122 = por %p120, %p121
    %p123 = scmp.ne.s32.totalorder %s115, %s118
    %p124 = scmp.eq.s32.totalorder %s11, 0
    %p125 = por %p123, %p124
    %p126 = scmp.ne.s32.totalorder %s115, %s118
    %p127 = scmp.eq.s32.totalorder %s16, 1
    %p128 = por %p126, %p127
    %p129 = scmp.ne.s32.totalorder %s118, %s119
    %p130 = scmp.eq.s32.totalorder %s16, 0
    %p131 = por %p129, %p130
    %p132 = scmp.ne.s32.totalorder %s118, %s119
    %p133 = scmp.eq.s32.totalorder %s17, 1
    %p134 = por %p132, %p133
    %p136 = scmp.ne.s32.totalorder %s119, %s135
    %p137 = scmp.eq.s32.totalorder %s17, 0
    %p138 = por %p136, %p137
    %p139 = scmp.le.s32.totalorder 1, %s11
    %p140 = scmp.lt.s32.totalorder %s11, 3
    %p141 = pnand %p139, %p140
    %p142 = pneg %p141
    // Predicated region
    $region9: #{tpu_custom_call.1} parent=5 // pred_check
      _
    $region10: #{tpu_custom_call.1} parent=5 // pred_check_branch
      %144 = sbr.rel (%p141) target = $region12
    $region11: #{tpu_custom_call.1} parent=5 // pred_region
      %s145 = ssub.s32 %s11, 1
      // Predicated region
      $region13: #{tpu_custom_call.1} parent=11 // pred_check
        %p146 = pneg %p58
      $region14: #{tpu_custom_call.1} parent=11 // pred_check_branch
        %148 = sbr.rel (%p146) target = $region16
      $region15: #{tpu_custom_call.1} parent=11 // pred_region
        _
      $region16: #{tpu_custom_call.1} parent=11 // pred_fallthru
        _
      // Predicated region
      $region17: #{tpu_custom_call.1} parent=11 // pred_check
        %p149 = pneg %p79
      $region18: #{tpu_custom_call.1} parent=11 // pred_check_branch
        %151 = sbr.rel (%p149) target = $region20
      $region19: #{tpu_custom_call.1} parent=11 // pred_region
        _
      $region20: #{tpu_custom_call.1} parent=11 // pred_fallthru
        _
    $region12: #{tpu_custom_call.1} parent=5 // pred_fallthru
      _
    %p152 = scmp.lt.s32.totalorder %s11, 2
    // Predicated region
    $region21: #{tpu_custom_call.1} parent=5 // pred_check
      %p153 = pneg %p152
    $region22: #{tpu_custom_call.1} parent=5 // pred_check_branch
      %155 = sbr.rel (%p153) target = $region24
    $region23: #{tpu_custom_call.1} parent=5 // pred_region
      // Predicated region
      $region25: #{tpu_custom_call.1} parent=23 // pred_check
        %p156 = pneg %p31
      $region26: #{tpu_custom_call.1} parent=23 // pred_check_branch
        %158 = sbr.rel (%p156) target = $region28
      $region27: #{tpu_custom_call.1} parent=23 // pred_region
        %s159 = smul.u32 4, %s11
        %p160 = scmp.lt.s32.totalorder %s159, 7
        %s161 = scalar_select %p160, %s159, 7
        %s162 = smul.addr %s161, 4
        %s163 = scalar_lea.vmem %s0, %s162
        %s164 = smul.u32 4, %s11
      $region28: #{tpu_custom_call.1} parent=23 // pred_fallthru
        _
    $region24: #{tpu_custom_call.1} parent=5 // pred_fallthru
      _
    %p165 = scmp.le.s32.totalorder 1, %s11
    %p166 = scmp.lt.s32.totalorder %s11, 3
    %p167 = pnand %p165, %p166
    %p168 = pneg %p167
    // Predicated region
    $region29: #{tpu_custom_call.1} parent=5 // pred_check
      _
    $region30: #{tpu_custom_call.1} parent=5 // pred_check_branch
      %170 = sbr.rel (%p167) target = $region32
    $region31: #{tpu_custom_call.1} parent=5 // pred_region
      %s171 = ssub.s32 %s11, 1
      %s172 = smul.u32 4, %s16
      %p173 = scmp.lt.s32.totalorder %s172, 7
      %s174 = scalar_select %p173, %s172, 7
      %s175 = smul.addr %s174, 4
      %s176 = scalar_lea.vmem %s0, %s175
      %p177 = pneg %p37
      %p178 = pneg %p34
      %p179 = pneg %p58
      %p180 = pneg %p55
      %p181 = pneg %p79
      %p182 = pneg %p76
      %p183 = pneg %p105
      %p184 = pneg %p102
      %s185 = smul.u32 4, %s16
      %p186 = scmp.lt.s32.totalorder %s185, 7
      %s187 = scalar_select %p186, %s185, 7
      %s188 = smul.addr %s187, 4
      %s189 = scalar_lea.vmem %s3, %s188
      %p190 = pneg %p131
      %p191 = pneg %p128
      %s192 = smul.u32 4, %s16
      %p193 = scmp.lt.s32.totalorder %s192, 7
      %s194 = scalar_select %p193, %s192, 7
      %s195 = smul.addr %s194, 8
      %s196 = scalar_lea.vmem %s4, %s195
      %s197 = smul.u32 4, %s16
      %p198 = scmp.lt.s32.totalorder %s197, 7
      %s199 = scalar_select %p198, %s197, 7
      %s200 = smul.addr %s199, 4
      %s201 = scalar_lea.vmem %s0, %s200
      %s202 = smul.u32 4, %s16
      %s203 = smul.u32 4, %s16
      %p204 = scmp.lt.s32.totalorder %s203, 7
      %s205 = scalar_select %p204, %s203, 7
      %s206 = smul.addr %s205, 4
      %s207 = scalar_lea.vmem %s3, %s206
      %s208 = smul.u32 4, %s16
      %s209 = smul.u32 4, %s16
      %p210 = scmp.lt.s32.totalorder %s209, 7
      %s211 = scalar_select %p210, %s209, 7
      %s212 = smul.addr %s211, 8
      %s213 = scalar_lea.vmem %s4, %s212
      %s214 = smul.u32 4, %s16
      %v216 = vld [vmem:[%s201] sm:$0xf]
      %v217 = vld [vmem:[%s201 + $0x4] sm:$0xf]
      %v218 = vld [vmem:[%s201 + $0x8] sm:$0xf]
      %v219 = vld [vmem:[%s201 + $0xc] sm:$0xf]
      %v220 = vld [vmem:[%s1] sm:$0xf]
      %v225 = vunpack.c.l.b16 %v216
      %v226 = vunpack.c.l.b16 %v217
      %v227 = vunpack.c.l.b16 %v218
      %v228 = vunpack.c.l.b16 %v219
      %v229 = vpack.c.b16 %v226, %v225
      %v230 = vpack.c.b16 %v228, %v227
      %vm231 = vcmask 64512
      %v233 = vsel %vm231, %v229, 0
      %v236 = vsel %vm231, %v230, 0
      %vm238 = vcmask 1043456
      %v240 = vsel %vm238, %v220, 0
      %242 = vmatprep.subr.bf16.mxu0 0
      %243 = vmatpush1.bf16.msra.mxu0 0
      %244 = vmatprep.subr.bf16.mxu0 0
      %245 = vmatpush1.bf16.msra.mxu0 0
      %246 = vmatprep.subr.bf16.mxu0 0
      %247 = vmatpush1.bf16.msra.mxu0 0
      %248 = vmatprep.subr.bf16.mxu0 0
      %249 = vmatpush1.bf16.msra.mxu0 0
      %250 = vmatprep.subr.bf16.mxu0 0
      %251 = vmatpush1.bf16.msra.mxu0 0
      %252 = vmatprep.subr.bf16.mxu0 0
      %253 = vmatpush1.bf16.msra.mxu0 0
      %254 = vmatprep.subr.bf16.mxu0 0
      %255 = vmatpush1.bf16.msra.mxu0 0
      %256 = vmatprep.subr.bf16.mxu0 0
      %257 = vmatpush1.bf16.msra.mxu0 %v240
      %258 = vmatprep.subr.bf16.mxu0 0
      %259 = vmatpush2.bf16.msra.mxu0 0
      %260 = vmatprep.subr.bf16.mxu0 0
      %261 = vmatpush2.bf16.msra.mxu0 0
      %262 = vmatprep.subr.bf16.mxu0 0
      %263 = vmatpush2.bf16.msra.mxu0 0
      %264 = vmatprep.subr.bf16.mxu0 0
      %265 = vmatpush2.bf16.msra.mxu0 0
      %266 = vmatprep.subr.bf16.mxu0 0
      %267 = vmatpush2.bf16.msra.mxu0 0
      %268 = vmatprep.subr.bf16.mxu0 0
      %269 = vmatpush2.bf16.msra.mxu0 0
      %270 = vmatprep.subr.bf16.mxu0 0
      %271 = vmatpush2.bf16.msra.mxu0 0
      %272 = vmatprep.subr.bf16.mxu0 0
      %273 = vmatpush2.bf16.msra.mxu0 0
      %274 = vmatprep.mubr.bf16.mxu0 0
      %275 = vmatmul.mubr.bf16.gmra.mxu0 %v233
      %v276 = vpop.f32.mrf.mxu0
      %v277 = vadd.f32 0.0, %v276
      %v278 = vpop.f32.mrf.mxu0
      %v279 = vpop.f32.mrf.mxu0
      %v280 = vadd.f32 0.0, %v279
      %v281 = vpop.f32.mrf.mxu0
      %282 = vmatprep.mubr.bf16.mxu0 0
      %283 = vmatmul.mubr.bf16.gmra.mxu0 %v236
      %v284 = vpop.f32.mrf.mxu0
      %v285 = vadd.f32 0.0, %v284
      %v286 = vpop.f32.mrf.mxu0
      %v287 = vpop.f32.mrf.mxu0
      %v288 = vadd.f32 0.0, %v287
      %v289 = vpop.f32.mrf.mxu0
      %290 = vdwg.mxu0
      %v291 = vpack.c.bf16 %v280, %v277
      %v292 = vpack.c.bf16 %v288, %v285
      %v295 = vunpack.c.l.b16 %v291
      %v296 = vunpack.c.h.b16 %v291
      %v297 = vunpack.c.l.b16 %v292
      %v298 = vunpack.c.h.b16 %v292
      %v299 = vpack.c.b16 %v295, %v295
      %v300 = vpack.c.b16 %v296, %v296
      %v301 = vpack.c.b16 %v297, %v297
      %v302 = vpack.c.b16 %v298, %v298
      %vm307 = vcmask 125952
      %308 = vst.msk [vmem:[%s207] sm:$0xf] %vm307, %v299
      %309 = vst.msk [vmem:[%s207 + $0x4] sm:$0xf] %vm307, %v300
      %310 = vst.msk [vmem:[%s207 + $0x8] sm:$0xf] %vm307, %v301
      %311 = vst.msk [vmem:[%s207 + $0xc] sm:$0xf] %vm307, %v302
      %v312 = vld [vmem:[%s2] sm:$0xf]
      %v313 = vld [vmem:[%s2 + $0x4] sm:$0xf]
      %v316 = vunpack.c.l.b16 %v312
      %v317 = vunpack.c.l.b16 %v313
      %v318 = vpack.c.b16 %v317, %v316
      %vm320 = vcmask 130048
      %v322 = vsel %vm320, %v291, 0
      %v325 = vsel %vm320, %v292, 0
      %327 = vmatprep.subr.bf16.mxu0 0
      %328 = vmatpush1.bf16.msra.mxu0 0
      %329 = vmatprep.subr.bf16.mxu0 0
      %330 = vmatpush1.bf16.msra.mxu0 0
      %331 = vmatprep.subr.bf16.mxu0 0
      %332 = vmatpush1.bf16.msra.mxu0 0
      %333 = vmatprep.subr.bf16.mxu0 0
      %334 = vmatpush1.bf16.msra.mxu0 0
      %335 = vmatprep.subr.bf16.mxu0 0
      %336 = vmatpush1.bf16.msra.mxu0 0
      %337 = vmatprep.subr.bf16.mxu0 0
      %338 = vmatpush1.bf16.msra.mxu0 0
      %339 = vmatprep.subr.bf16.mxu0 0
      %340 = vmatpush1.bf16.msra.mxu0 0
      %341 = vmatprep.subr.bf16.mxu0 0
      %342 = vmatpush1.bf16.msra.mxu0 %v318
      %343 = vmatprep.subr.bf16.mxu0 0
      %344 = vmatpush2.bf16.msra.mxu0 0
      %345 = vmatprep.subr.bf16.mxu0 0
      %346 = vmatpush2.bf16.msra.mxu0 0
      %347 = vmatprep.subr.bf16.mxu0 0
      %348 = vmatpush2.bf16.msra.mxu0 0
      %349 = vmatprep.subr.bf16.mxu0 0
      %350 = vmatpush2.bf16.msra.mxu0 0
      %351 = vmatprep.subr.bf16.mxu0 0
      %352 = vmatpush2.bf16.msra.mxu0 0
      %353 = vmatprep.subr.bf16.mxu0 0
      %354 = vmatpush2.bf16.msra.mxu0 0
      %355 = vmatprep.subr.bf16.mxu0 0
      %356 = vmatpush2.bf16.msra.mxu0 0
      %357 = vmatprep.subr.bf16.mxu0 0
      %358 = vmatpush2.bf16.msra.mxu0 0
      %359 = vmatprep.mubr.bf16.mxu0 0
      %360 = vmatmul.mubr.bf16.gmra.mxu0 %v322
      %v361 = vpop.f32.mrf.mxu0
      %v362 = vadd.f32 0.0, %v361
      %v363 = vpop.f32.mrf.mxu0
      %v364 = vpop.f32.mrf.mxu0
      %v365 = vadd.f32 0.0, %v364
      %v366 = vpop.f32.mrf.mxu0
      %367 = vmatprep.mubr.bf16.mxu0 0
      %368 = vmatmul.mubr.bf16.gmra.mxu0 %v325
      %v369 = vpop.f32.mrf.mxu0
      %v370 = vadd.f32 0.0, %v369
      %v371 = vpop.f32.mrf.mxu0
      %v372 = vpop.f32.mrf.mxu0
      %v373 = vadd.f32 0.0, %v372
      %v374 = vpop.f32.mrf.mxu0
      %375 = vdwg.mxu0
      %vm376 = vcmask 31744
      %377 = vst.msk [vmem:[%s213] sm:$0xff] %vm376, %v362
      %378 = vst.msk [vmem:[%s213 + $0x8] sm:$0xff] %vm376, %v365
      %379 = vst.msk [vmem:[%s213 + $0x10] sm:$0xff] %vm376, %v370
      %380 = vst.msk [vmem:[%s213 + $0x18] sm:$0xff] %vm376, %v373
      %s381 = smul.u32 4, %s16
      %p382 = scmp.lt.s32.totalorder %s381, 7
      %s383 = scalar_select %p382, %s381, 7
      %s384 = smul.addr %s383, 4
      %s385 = scalar_lea.vmem %s3, %s384
      %s386 = smul.u32 4, %s16
      %p387 = scmp.lt.s32.totalorder %s386, 7
      %s388 = scalar_select %p387, %s386, 7
      %s389 = smul.addr %s388, 8
      %s390 = scalar_lea.vmem %s4, %s389
      // Predicated region
      $region33: #{tpu_custom_call.1} parent=31 // pred_check
        %p391 = pneg %p102
      $region34: #{tpu_custom_call.1} parent=31 // pred_check_branch
        %393 = sbr.rel (%p391) target = $region36
      $region35: #{tpu_custom_call.1} parent=31 // pred_region
        %s394 = smul.u32 4, %s16
      $region36: #{tpu_custom_call.1} parent=31 // pred_fallthru
        _
      // Predicated region
      $region37: #{tpu_custom_call.1} parent=31 // pred_check
        %p395 = pneg %p128
      $region38: #{tpu_custom_call.1} parent=31 // pred_check_branch
        %397 = sbr.rel (%p395) target = $region40
      $region39: #{tpu_custom_call.1} parent=31 // pred_region
        %s398 = smul.u32 4, %s16
      $region40: #{tpu_custom_call.1} parent=31 // pred_fallthru
        _
    $region32: #{tpu_custom_call.1} parent=5 // pred_fallthru
      _
    %p399 = scmp.le.s32.totalorder 2, %s11
    // Predicated region
    $region41: #{tpu_custom_call.1} parent=5 // pred_check
      %p400 = pneg %p399
    $region42: #{tpu_custom_call.1} parent=5 // pred_check_branch
      %402 = sbr.rel (%p400) target = $region44
    $region43: #{tpu_custom_call.1} parent=5 // pred_region
      %s403 = ssub.s32 %s11, 2
      // Predicated region
      $region45: #{tpu_custom_call.1} parent=43 // pred_check
        %p404 = pneg %p108
      $region46: #{tpu_custom_call.1} parent=43 // pred_check_branch
        %406 = sbr.rel (%p404) target = $region48
      $region47: #{tpu_custom_call.1} parent=43 // pred_region
        %s407 = smul.u32 4, %s17
        %p408 = scmp.lt.s32.totalorder %s407, 7
        %s409 = scalar_select %p408, %s407, 7
        %s410 = smul.addr %s409, 4
        %s411 = scalar_lea.vmem %s3, %s410
      $region48: #{tpu_custom_call.1} parent=43 // pred_fallthru
        _
      // Predicated region
      $region49: #{tpu_custom_call.1} parent=43 // pred_check
        %p412 = pneg %p134
      $region50: #{tpu_custom_call.1} parent=43 // pred_check_branch
        %414 = sbr.rel (%p412) target = $region52
      $region51: #{tpu_custom_call.1} parent=43 // pred_region
        %s415 = smul.u32 4, %s17
        %p416 = scmp.lt.s32.totalorder %s415, 7
        %s417 = scalar_select %p416, %s415, 7
        %s418 = smul.addr %s417, 8
        %s419 = scalar_lea.vmem %s4, %s418
      $region52: #{tpu_custom_call.1} parent=43 // pred_fallthru
        _
    $region44: #{tpu_custom_call.1} parent=5 // pred_fallthru
      _
  $region6: #{tpu_custom_call.1} parent=0 // loop_footer
    %s15 = sadd.s32 1, %s11
  $region7: #{tpu_custom_call.1} parent=0 // loop_footer_branch
    %10 = sbr.rel target = $region3
  $region8: #{tpu_custom_call.1} parent=0 // loop_exit
    _

</llo_original>
